<compile_context>
chip_gen: v5e
topology: v5e:2x2
jax: 0.10.0
libtpu: 0.0.40
codegen_flags: <defaults>
</compile_context>

<pallas_src>
import functools
import math

import jax
import jax.numpy as jnp
from jax.experimental import pallas as pl
from jax.experimental.pallas import tpu as pltpu


def autopad(k, p=None, d=1):
    if d > 1:
        k = d * (k - 1) + 1 if isinstance(k, int) else [d * (x - 1) + 1 for x in k]
    if p is None:
        p = k // 2 if isinstance(k, int) else [x // 2 for x in k]
    return p


def _vmem_capacity_bytes():
    try:
        return int(pltpu.get_tpu_info().vmem_capacity_bytes)
    except Exception:
        return 64 * 2 ** 20  # conservative fallback (v7x per-TC VMEM)


def _pick_tile_rows(oh, ow, target_rows, min_tiles=1):
    """Largest divisor TH of oh with TH*ow <= target_rows and oh//TH >= min_tiles."""
    cap = max(1, min(oh, target_rows // max(ow, 1)))
    if min_tiles > 1:
        cap = min(cap, max(1, oh // min_tiles))
    for th in range(cap, 0, -1):
        if oh % th == 0 and (oh // th) >= min_tiles:
            return th
    return 1


def conv_bn_silu(x_nchw, weight, bias, gamma, beta, run_mean, run_var,
                 k=3, s=1, p=None, eps=1e-5, target_rows=None):
    """Forward of the Conv module: SiLU(BN(Conv2d(x))). x_nchw: (N, C1, H, W).

    Returns bf16 NCHW output (accumulation is f32 on the MXU).
    """
    assert s == 1, "TODO(synk): stride > 1 not implemented in the fused path"
    p = autopad(k, p, 1)
    N, C1, H, W = x_nchw.shape
    C2 = weight.shape[0]
    assert weight.shape == (C2, C1, k, k), "groups/dilation != 1 not supported"
    H_pad, W_pad = H + 2 * p, W + 2 * p
    OH = H_pad - k + 1
    OW = W_pad - k + 1

    vmem_cap = _vmem_capacity_bytes()
    if target_rows is None:
        # Bigger tiles amortize per-grid-step overhead on 128 MiB-VMEM parts.
        target_rows = 2048 if vmem_cap >= 96 * 2 ** 20 else 1024

    # >= 2 parallel grid steps when possible (keeps both v7x TensorCores busy).
    min_tiles = 2 if N == 1 else 1
    TH = _pick_tile_rows(OH, OW, target_rows, min_tiles)  # output rows / step
    T = OH // TH                                          # row tiles per image
    NT = N * T
    rows = TH + k - 1                                     # input rows per step
    WPC1 = W_pad * C1

    # Pad output channels so the output lane width OW*C2p is a multiple of 128
    # (lane-dense unmasked stores); padded channels are sliced off afterwards.
    m = 128 // math.gcd(OW, 128)
    C2p = ((C2 + m - 1) // m) * m
    OWC2 = OW * C2p

    # ---- glue: NCHW -> NHWC, pad, bf16; no halo copy when T == 1 ----
    x = jnp.transpose(x_nchw, (0, 2, 3, 1)).astype(jnp.bfloat16)   # (N,H,W,C1)
    x = jnp.pad(x, ((0, 0), (p, p), (p, p), (0, 0)))               # (N,H_pad,W_pad,C1)
    if T == 1:
        xt = x.reshape(N, H_pad, WPC1)                             # free reshape
    else:
        # TODO(synk): replace this HBM halo copy with element-indexed windows.
        tiles = [x[:, t * TH: t * TH + rows, :, :] for t in range(T)]
        xt = jnp.stack(tiles, axis=1).reshape(NT, rows, WPC1)

    # ---- fold BN (eval) + conv bias; fold scale into the weight ----
    scale = gamma / jnp.sqrt(run_var + eps)                        # (C2,)
    shift = beta + scale * (bias - run_mean)                       # (C2,)
    w_hwio = jnp.transpose(weight, (2, 3, 1, 0))                   # (k,k,C1,C2)
    w_scaled = (w_hwio * scale[None, None, None, :]).astype(jnp.float32)
    if C2p != C2:
        w_scaled = jnp.pad(w_scaled, ((0, 0), (0, 0), (0, 0), (0, C2p - C2)))
        shift = jnp.pad(shift, ((0, C2p - C2),))

    # kw-folded block-banded weight: (k, W_pad*C1, OW*C2p) with
    # w_banded[kh, (ow+kw)*C1+ci, ow*C2p+co] = w_scaled[kh, kw, ci, co].
    sel = (jnp.arange(W_pad)[None, :, None]
           == jnp.arange(OW)[:, None, None] + jnp.arange(k)[None, None, :])
    w_banded = jnp.einsum('opq,hqic->hpioc', sel.astype(jnp.float32), w_scaled)
    w_banded = w_banded.reshape(k, WPC1, OWC2).astype(jnp.bfloat16)

    shift_tiled = jnp.tile(shift.reshape(1, C2p), (1, OW)).astype(jnp.float32)

    # ---- VMEM budget & cost estimate ----
    in_tile_b = rows * WPC1 * 2
    out_tile_b = TH * OWC2 * 2
    acc_b = TH * OWC2 * 4
    w_b = k * WPC1 * OWC2 * 2
    shift_b = OWC2 * 4
    # in/out double-buffered; weight/shift also get 2 buffers (see Buffered TODO).
    vmem_need = 2 * in_tile_b + 2 * out_tile_b + 2 * w_b + 2 * shift_b + acc_b
    vmem_limit = int(min(vmem_cap // 2, max(4 * 2 ** 20, 2 * vmem_need)))

    macs_issued = NT * k * TH * WPC1 * OWC2        # banded inflation ~ W_pad/k
    cost = pl.CostEstimate(
        flops=2 * macs_issued,
        transcendentals=NT * TH * OWC2,
        bytes_accessed=xt.size * 2 + w_banded.size * 2 + shift_tiled.size * 4
                       + NT * TH * OWC2 * 2,
    )

    # ---------------------------- Pallas kernel ------------------------------
    def kernel(xt_ref, w_ref, shift_ref, o_ref):
        # xt_ref:    (1, rows, W_pad*C1)   bf16  padded-input row window
        # w_ref:     (k, W_pad*C1, OW*C2p) bf16  BN-folded block-banded weight
        # shift_ref: (1, OW*C2p)           f32   folded BN/bias shift
        # o_ref:     (1, TH, OW*C2p)       bf16  lane-dense output tile
        acc = jnp.broadcast_to(shift_ref[...], (TH, OWC2)).astype(jnp.float32)
        for kh in range(k):                  # k taps, statically unrolled
            acc = acc + jnp.dot(xt_ref[0, kh:kh + TH, :], w_ref[kh],
                                preferred_element_type=jnp.float32)
        # SiLU(y) = y * sigmoid(y); exp and approx reciprocal go to the EUP.
        sig = pl.reciprocal(1.0 + jnp.exp(-acc), approx=True)
        o_ref[0] = (acc * sig).astype(o_ref.dtype)

    out_flat = pl.pallas_call(
        kernel,
        out_shape=jax.ShapeDtypeStruct((NT, TH, OWC2), jnp.bfloat16),
        grid_spec=pltpu.PrefetchScalarGridSpec(
            num_scalar_prefetch=0,
            grid=(NT,),
            in_specs=[
                pl.BlockSpec((1, rows, WPC1), lambda i: (i, 0, 0)),
                pl.BlockSpec((k, WPC1, OWC2), lambda i: (0, 0, 0)),
                pl.BlockSpec((1, OWC2), lambda i: (0, 0)),
            ],
            out_specs=pl.BlockSpec((1, TH, OWC2), lambda i: (i, 0, 0)),
        ),
        compiler_params=pltpu.CompilerParams(
            dimension_semantics=("parallel",),
            vmem_limit_bytes=vmem_limit,
        ),
        cost_estimate=cost,
    )(xt, w_banded, shift_tiled)

    # ---- glue: (NT, TH, OW*C2p) row-major == (N, OH, OW, C2p) -> NCHW ----
    out = out_flat.reshape(N, OH, OW, C2p)
    if C2p != C2:
        out = out[..., :C2]
    return jnp.transpose(out, (0, 3, 1, 2))                        # (N,C2,OH,OW)


# ------------------------------- reference -----------------------------------
def reference(x_nchw, weight, bias, gamma, beta, run_mean, run_var, k, s, p, eps=1e-5):
    z = jax.lax.conv_general_dilated(
        x_nchw.astype(jnp.float32), weight.astype(jnp.float32),
        window_strides=(s, s), padding=[(p, p), (p, p)],
        dimension_numbers=("NCHW", "OIHW", "NCHW"))
    z = z + bias.reshape(1, -1, 1, 1)
    z = (z - run_mean.reshape(1, -1, 1, 1)) / jnp.sqrt(run_var.reshape(1, -1, 1, 1) + eps)
    z = z * gamma.reshape(1, -1, 1, 1) + beta.reshape(1, -1, 1, 1)
    return z * jax.nn.sigmoid(z)


if __name__ == "__main__":
    # Conv(c1=4, c2=8, k=3, s=1) -> autopad p=1
    N, C1, H, W = 2, 4, 16, 16
    C2, K, S = 8, 3, 1
    P = autopad(K, None, 1)

    key = jax.random.PRNGKey(0)
    kx, kw_, kb, kg, kbt, km, kv = jax.random.split(key, 7)

    x = jax.random.normal(kx, (N, C1, H, W), dtype=jnp.float32)
    weight = jax.random.normal(kw_, (C2, C1, K, K), dtype=jnp.float32) * 0.1
    bias = jax.random.normal(kb, (C2,), dtype=jnp.float32) * 0.1
    gamma = 1.0 + 0.1 * jax.random.normal(kg, (C2,), dtype=jnp.float32)
    beta = 0.1 * jax.random.normal(kbt, (C2,), dtype=jnp.float32)
    run_mean = 0.1 * jax.random.normal(km, (C2,), dtype=jnp.float32)
    run_var = jnp.abs(1.0 + 0.1 * jax.random.normal(kv, (C2,), dtype=jnp.float32))

    # Quantize test data onto the bf16 grid so the comparison isolates kernel
    # correctness from bf16 input-rounding noise (kernel computes in bf16/f32).
    x = x.astype(jnp.bfloat16).astype(jnp.float32)
    weight = weight.astype(jnp.bfloat16).astype(jnp.float32)

    conv_fn = jax.jit(functools.partial(conv_bn_silu, k=K, s=S, p=P))
    out = conv_fn(x, weight, bias, gamma, beta, run_mean, run_var)
    out = jax.block_until_ready(out)

    ref = reference(x, weight, bias, gamma, beta, run_mean, run_var, K, S, P)
    assert out.shape == (N, C2, H, W)
    err = jnp.max(jnp.abs(out.astype(jnp.float32) - ref))
    assert jnp.allclose(out.astype(jnp.float32), ref, atol=1e-2, rtol=1e-2), \
        f"mismatch vs reference (max err {err})"

    print("KERNEL_OK")
</pallas_src>

<mosaic_0001>
module attributes {stable_mosaic.version = 11 : i64} {
  func.func @kernel(%arg0: i32, %arg1: memref<1x18x72xbf16, #tpu.memory_space<vmem>>, %arg2: memref<3x72x128xbf16, #tpu.memory_space<vmem>>, %arg3: memref<1x128xf32, #tpu.memory_space<vmem>>, %arg4: memref<1x16x128xbf16, #tpu.memory_space<vmem>>) attributes {dimension_semantics = [#tpu.dimension_semantics<parallel>], iteration_bounds = array<i64: 2>, scalar_prefetch = 0 : i64, scratch_operands = 0 : i64, tpu.core_type = #tpu.core_type<tc>, window_params = [{transform_indices = @transform_0, window_bounds = array<i64: 1, 18, 72>}, {pipeline_mode = #tpu.pipeline_mode<synchronous>, transform_indices = @transform_1, window_bounds = array<i64: 3, 72, 128>}, {pipeline_mode = #tpu.pipeline_mode<synchronous>, transform_indices = @transform_2, window_bounds = array<i64: 1, 128>}, {transform_indices = @transform_3, window_bounds = array<i64: 1, 16, 128>}]} {
    %c0 = arith.constant 0 : index
    %c0_0 = arith.constant 0 : index
    %0 = vector.load %arg3[%c0, %c0_0] : memref<1x128xf32, #tpu.memory_space<vmem>>, vector<1x128xf32>
    %1 = vector.shape_cast %0 : vector<1x128xf32> to vector<1x128xf32>
    %2 = vector.broadcast %1 : vector<1x128xf32> to vector<16x128xf32>
    %c0_1 = arith.constant 0 : index
    %c0_2 = arith.constant 0 : index
    %c0_3 = arith.constant 0 : index
    %3 = vector.load %arg1[%c0_1, %c0_2, %c0_3] : memref<1x18x72xbf16, #tpu.memory_space<vmem>>, vector<1x16x72xbf16>
    %4 = vector.shape_cast %3 : vector<1x16x72xbf16> to vector<16x72xbf16>
    %c0_4 = arith.constant 0 : index
    %c0_5 = arith.constant 0 : index
    %c0_6 = arith.constant 0 : index
    %5 = vector.load %arg2[%c0_4, %c0_5, %c0_6] : memref<3x72x128xbf16, #tpu.memory_space<vmem>>, vector<1x72x128xbf16>
    %6 = vector.shape_cast %5 : vector<1x72x128xbf16> to vector<72x128xbf16>
    %cst = arith.constant dense<0.000000e+00> : vector<16x128xf32>
    %7 = tpu.matmul %4, %6, %cst {dimension_numbers = #tpu.dot_dimension_numbers<[1], [0], [0], [1], [0, 0, 1, 1], [], []>} : vector<16x72xbf16>, vector<72x128xbf16>, vector<16x128xf32> -> vector<16x128xf32>
    %8 = arith.addf %2, %7 : vector<16x128xf32>
    %c0_7 = arith.constant 0 : index
    %c1 = arith.constant 1 : index
    %c0_8 = arith.constant 0 : index
    %9 = vector.load %arg1[%c0_7, %c1, %c0_8] : memref<1x18x72xbf16, #tpu.memory_space<vmem>>, vector<1x16x72xbf16>
    %10 = vector.shape_cast %9 : vector<1x16x72xbf16> to vector<16x72xbf16>
    %c1_9 = arith.constant 1 : index
    %c0_10 = arith.constant 0 : index
    %c0_11 = arith.constant 0 : index
    %11 = vector.load %arg2[%c1_9, %c0_10, %c0_11] : memref<3x72x128xbf16, #tpu.memory_space<vmem>>, vector<1x72x128xbf16>
    %12 = vector.shape_cast %11 : vector<1x72x128xbf16> to vector<72x128xbf16>
    %cst_12 = arith.constant dense<0.000000e+00> : vector<16x128xf32>
    %13 = tpu.matmul %10, %12, %cst_12 {dimension_numbers = #tpu.dot_dimension_numbers<[1], [0], [0], [1], [0, 0, 1, 1], [], []>} : vector<16x72xbf16>, vector<72x128xbf16>, vector<16x128xf32> -> vector<16x128xf32>
    %14 = arith.addf %8, %13 : vector<16x128xf32>
    %c0_13 = arith.constant 0 : index
    %c2 = arith.constant 2 : index
    %c0_14 = arith.constant 0 : index
    %15 = vector.load %arg1[%c0_13, %c2, %c0_14] : memref<1x18x72xbf16, #tpu.memory_space<vmem>>, vector<1x16x72xbf16>
    %16 = vector.shape_cast %15 : vector<1x16x72xbf16> to vector<16x72xbf16>
    %c2_15 = arith.constant 2 : index
    %c0_16 = arith.constant 0 : index
    %c0_17 = arith.constant 0 : index
    %17 = vector.load %arg2[%c2_15, %c0_16, %c0_17] : memref<3x72x128xbf16, #tpu.memory_space<vmem>>, vector<1x72x128xbf16>
    %18 = vector.shape_cast %17 : vector<1x72x128xbf16> to vector<72x128xbf16>
    %cst_18 = arith.constant dense<0.000000e+00> : vector<16x128xf32>
    %19 = tpu.matmul %16, %18, %cst_18 {dimension_numbers = #tpu.dot_dimension_numbers<[1], [0], [0], [1], [0, 0, 1, 1], [], []>} : vector<16x72xbf16>, vector<72x128xbf16>, vector<16x128xf32> -> vector<16x128xf32>
    %20 = arith.addf %14, %19 : vector<16x128xf32>
    %cst_19 = arith.constant 0.000000e+00 : f32
    %21 = vector.broadcast %cst_19 : f32 to vector<16x128xf32>
    %22 = arith.subf %21, %20 : vector<16x128xf32>
    %23 = math.exp %22 : vector<16x128xf32>
    %cst_20 = arith.constant 1.000000e+00 : f32
    %24 = vector.broadcast %cst_20 : f32 to vector<16x128xf32>
    %25 = arith.addf %24, %23 : vector<16x128xf32>
    %26 = tpu.reciprocal %25 {approx = true} : vector<16x128xf32> -> vector<16x128xf32>
    %27 = arith.mulf %20, %26 : vector<16x128xf32>
    %28 = arith.truncf %27 : vector<16x128xf32> to vector<16x128xbf16>
    %c0_21 = arith.constant 0 : index
    %c0_22 = arith.constant 0 : index
    %c0_23 = arith.constant 0 : index
    %29 = vector.load %arg4[%c0_21, %c0_22, %c0_23] : memref<1x16x128xbf16, #tpu.memory_space<vmem>>, vector<1x16x128xbf16>
    %30 = vector.shape_cast %29 : vector<1x16x128xbf16> to vector<16x128xbf16>
    %31 = vector.shape_cast %28 : vector<16x128xbf16> to vector<1x16x128xbf16>
    tpu.vector_store %arg4[%c0_21, %c0_22, %c0_23], %31 {strides = array<i32>} : memref<1x16x128xbf16, #tpu.memory_space<vmem>>, vector<1x16x128xbf16>,
    return
  }
  func.func @transform_0(%arg0: i32) -> (i32, i32, i32) {
    %c0_i32 = arith.constant 0 : i32
    %c0_i32_0 = arith.constant 0 : i32
    %c0_i32_1 = arith.constant 0 : i32
    return %arg0, %c0_i32, %c0_i32_0 : i32, i32, i32
  }
  func.func @transform_1(%arg0: i32) -> (i32, i32, i32) {
    %c0_i32 = arith.constant 0 : i32
    %c0_i32_0 = arith.constant 0 : i32
    %c0_i32_1 = arith.constant 0 : i32
    %c0_i32_2 = arith.constant 0 : i32
    return %c0_i32, %c0_i32_0, %c0_i32_1 : i32, i32, i32
  }
  func.func @transform_2(%arg0: i32) -> (i32, i32) {
    %c0_i32 = arith.constant 0 : i32
    %c0_i32_0 = arith.constant 0 : i32
    %c0_i32_1 = arith.constant 0 : i32
    return %c0_i32, %c0_i32_0 : i32, i32
  }
  func.func @transform_3(%arg0: i32) -> (i32, i32, i32) {
    %c0_i32 = arith.constant 0 : i32
    %c0_i32_0 = arith.constant 0 : i32
    %c0_i32_1 = arith.constant 0 : i32
    return %arg0, %c0_i32, %c0_i32_0 : i32, i32, i32
  }
}

</mosaic_0001>

<llo_original>
// kernel: conv_bn_silu.1
$region0: #{conv_bn_silu.1}
  #allocation0 [shape = 'u32[]', space=smem, size = 0x4, offset = 0x4, fixed_abs, tag = 'smem constant byte address 0x4 - core index']
  #allocation1 [shape = 'u32[72,128]{1,0:T(1,128)}', space=vmem, size = 0x9000, scoped, tag = 'internal scratch']
  %s0 = inlined_call_operand.vmem [shape: bf16[2,18,72], index: 0, kind: input, shape index: {}]
  %s1 = inlined_call_operand.vmem [shape: bf16[3,72,128], index: 1, kind: input, shape index: {}]
  %s2 = inlined_call_operand.vmem [shape: f32[1,128], index: 2, kind: input, shape index: {}]
  %s3 = inlined_call_operand.vmem [shape: bf16[2,16,128], index: 3, kind: output, shape index: {}]
  %s4 = sld [smem:[#allocation0]]
  $region45: #{conv_bn_silu.1} parent=0
    _
  %s6 = ssub.s32 1, %s4
  %s7 = scalar_select 0, %s6, %s4
  loop: start=0, step=1, limit=4
  $region2: #{conv_bn_silu.1} parent=0 // loop_pre_header
    _
  $region3: #{conv_bn_silu.1} parent=0 // loop_header
    %s9 = sphi 0, %s13
    %p10 = scmp.ge.s32.totalorder %s9, 4
    %s19 = sphi 0, %s21
    %s22 = sphi 0, %s19
    %s23 = sphi 0, %s22
    %s39 = sphi 0, %s23
    %s43 = sphi 0, %s43
    %s45 = sphi 0, %s43
    %s46 = sphi 0, %s45
    %s60 = sphi 0, %s46
    %s64 = sphi 0, %s64
    %s66 = sphi 0, %s64
    %s67 = sphi 0, %s66
    %s81 = sphi 0, %s67
    %s87 = sphi 0, %s89
    %s90 = sphi 0, %s87
    %s91 = sphi 0, %s90
    %s107 = sphi 0, %s91
  $region4: #{conv_bn_silu.1} parent=0 // loop_header_branch
    %12 = sbr.rel (%p10) target = $region8
  $region5: #{conv_bn_silu.1} parent=0 // loop_body
    %s14 = ssub.s32 %s9, 1
    %s15 = ssub.s32 %s9, 2
    %s16 = sadd.s32 %s9, 1
    %s17 = ssub.s32 %s9, %s16
    %p18 = scmp.eq.s32.totalorder %s17, 0
    %s20 = sadd.s32 %s19, 1
    %s21 = scalar_select %p18, %s19, %s20
    %p24 = pneg %p18
    %p25 = scmp.eq.s32.totalorder %s9, 1
    %p26 = por %p24, %p25
    %p27 = scmp.ne.s32.totalorder %s19, %s22
    %p28 = scmp.eq.s32.totalorder %s9, 0
    %p29 = por %p27, %p28
    %p30 = scmp.ne.s32.totalorder %s19, %s22
    %p31 = scmp.eq.s32.totalorder %s14, 1
    %p32 = por %p30, %p31
    %p33 = scmp.ne.s32.totalorder %s22, %s23
    %p34 = scmp.eq.s32.totalorder %s14, 0
    %p35 = por %p33, %p34
    %p36 = scmp.ne.s32.totalorder %s22, %s23
    %p37 = scmp.eq.s32.totalorder %s15, 1
    %p38 = por %p36, %p37
    %p40 = scmp.ne.s32.totalorder %s23, %s39
    %p41 = scmp.eq.s32.totalorder %s15, 0
    %p42 = por %p40, %p41
    %s44 = sadd.s32 %s43, 1
    %p47 = scmp.eq.s32.totalorder %s9, 1
    %p48 = scmp.ne.s32.totalorder %s43, %s45
    %p49 = scmp.eq.s32.totalorder %s9, 0
    %p50 = por %p48, %p49
    %p51 = scmp.ne.s32.totalorder %s43, %s45
    %p52 = scmp.eq.s32.totalorder %s14, 1
    %p53 = por %p51, %p52
    %p54 = scmp.ne.s32.totalorder %s45, %s46
    %p55 = scmp.eq.s32.totalorder %s14, 0
    %p56 = por %p54, %p55
    %p57 = scmp.ne.s32.totalorder %s45, %s46
    %p58 = scmp.eq.s32.totalorder %s15, 1
    %p59 = por %p57, %p58
    %p61 = scmp.ne.s32.totalorder %s46, %s60
    %p62 = scmp.eq.s32.totalorder %s15, 0
    %p63 = por %p61, %p62
    %s65 = sadd.s32 %s64, 1
    %p68 = scmp.eq.s32.totalorder %s9, 1
    %p69 = scmp.ne.s32.totalorder %s64, %s66
    %p70 = scmp.eq.s32.totalorder %s9, 0
    %p71 = por %p69, %p70
    %p72 = scmp.ne.s32.totalorder %s64, %s66
    %p73 = scmp.eq.s32.totalorder %s14, 1
    %p74 = por %p72, %p73
    %p75 = scmp.ne.s32.totalorder %s66, %s67
    %p76 = scmp.eq.s32.totalorder %s14, 0
    %p77 = por %p75, %p76
    %p78 = scmp.ne.s32.totalorder %s66, %s67
    %p79 = scmp.eq.s32.totalorder %s15, 1
    %p80 = por %p78, %p79
    %p82 = scmp.ne.s32.totalorder %s67, %s81
    %p83 = scmp.eq.s32.totalorder %s15, 0
    %p84 = por %p82, %p83
    %s85 = ssub.s32 %s9, %s16
    %p86 = scmp.eq.s32.totalorder %s85, 0
    %s88 = sadd.s32 %s87, 1
    %s89 = scalar_select %p86, %s87, %s88
    %p92 = pneg %p86
    %p93 = scmp.eq.s32.totalorder %s9, 1
    %p94 = por %p92, %p93
    %p95 = scmp.ne.s32.totalorder %s87, %s90
    %p96 = scmp.eq.s32.totalorder %s9, 0
    %p97 = por %p95, %p96
    %p98 = scmp.ne.s32.totalorder %s87, %s90
    %p99 = scmp.eq.s32.totalorder %s14, 1
    %p100 = por %p98, %p99
    %p101 = scmp.ne.s32.totalorder %s90, %s91
    %p102 = scmp.eq.s32.totalorder %s14, 0
    %p103 = por %p101, %p102
    %p104 = scmp.ne.s32.totalorder %s90, %s91
    %p105 = scmp.eq.s32.totalorder %s15, 1
    %p106 = por %p104, %p105
    %p108 = scmp.ne.s32.totalorder %s91, %s107
    %p109 = scmp.eq.s32.totalorder %s15, 0
    %p110 = por %p108, %p109
    %p111 = scmp.le.s32.totalorder 1, %s9
    %p112 = scmp.lt.s32.totalorder %s9, 3
    %p113 = pnand %p111, %p112
    %p114 = pneg %p113
    // Predicated region
    $region9: #{conv_bn_silu.1} parent=5 // pred_check
      _
    $region10: #{conv_bn_silu.1} parent=5 // pred_check_branch
      %116 = sbr.rel (%p113) target = $region12
    $region11: #{conv_bn_silu.1} parent=5 // pred_region
      %s117 = ssub.s32 %s9, 1
      // Predicated region
      $region13: #{conv_bn_silu.1} parent=11 // pred_check
        %p118 = pneg %p56
      $region14: #{conv_bn_silu.1} parent=11 // pred_check_branch
        %120 = sbr.rel (%p118) target = $region16
      $region15: #{conv_bn_silu.1} parent=11 // pred_region
        _
      $region16: #{conv_bn_silu.1} parent=11 // pred_fallthru
        _
      // Predicated region
      $region17: #{conv_bn_silu.1} parent=11 // pred_check
        %p121 = pneg %p77
      $region18: #{conv_bn_silu.1} parent=11 // pred_check_branch
        %123 = sbr.rel (%p121) target = $region20
      $region19: #{conv_bn_silu.1} parent=11 // pred_region
        _
      $region20: #{conv_bn_silu.1} parent=11 // pred_fallthru
        _
    $region12: #{conv_bn_silu.1} parent=5 // pred_fallthru
      _
    %p124 = scmp.lt.s32.totalorder %s9, 2
    // Predicated region
    $region21: #{conv_bn_silu.1} parent=5 // pred_check
      %p125 = pneg %p124
    $region22: #{conv_bn_silu.1} parent=5 // pred_check_branch
      %127 = sbr.rel (%p125) target = $region24
    $region23: #{conv_bn_silu.1} parent=5 // pred_region
      // Predicated region
      $region25: #{conv_bn_silu.1} parent=23 // pred_check
        %p128 = pneg %p29
      $region26: #{conv_bn_silu.1} parent=23 // pred_check_branch
        %130 = sbr.rel (%p128) target = $region28
      $region27: #{conv_bn_silu.1} parent=23 // pred_region
        %p131 = scmp.lt.s32.totalorder %s9, 1
        %s132 = scalar_select %p131, %s9, 1
        %s133 = smul.addr %s132, 3
        %s134 = smul.addr %s133, 4
        %s135 = scalar_lea.vmem %s0, %s134
      $region28: #{conv_bn_silu.1} parent=23 // pred_fallthru
        _
    $region24: #{conv_bn_silu.1} parent=5 // pred_fallthru
      _
    %p136 = scmp.le.s32.totalorder 1, %s9
    %p137 = scmp.lt.s32.totalorder %s9, 3
    %p138 = pnand %p136, %p137
    %p139 = pneg %p138
    // Predicated region
    $region29: #{conv_bn_silu.1} parent=5 // pred_check
      _
    $region30: #{conv_bn_silu.1} parent=5 // pred_check_branch
      %141 = sbr.rel (%p138) target = $region32
    $region31: #{conv_bn_silu.1} parent=5 // pred_region
      %s142 = ssub.s32 %s9, 1
      %p143 = scmp.lt.s32.totalorder %s14, 1
      %s144 = scalar_select %p143, %s14, 1
      %s145 = smul.addr %s144, 3
      %s146 = smul.addr %s145, 4
      %s147 = scalar_lea.vmem %s0, %s146
      %p148 = pneg %p35
      %p149 = pneg %p32
      %p150 = pneg %p56
      %p151 = pneg %p53
      %p152 = pneg %p77
      %p153 = pneg %p74
      %p154 = pneg %p103
      %p155 = pneg %p100
      %p156 = scmp.lt.s32.totalorder %s14, 1
      %s157 = scalar_select %p156, %s14, 1
      %s158 = smul.addr %s157, 2
      %s159 = smul.addr %s158, 4
      %s160 = scalar_lea.vmem %s3, %s159
      %p161 = scmp.lt.s32.totalorder %s14, 1
      %s162 = scalar_select %p161, %s14, 1
      %s163 = smul.addr %s162, 3
      %s164 = smul.addr %s163, 4
      %s165 = scalar_lea.vmem %s0, %s164
      %p166 = scmp.lt.s32.totalorder %s14, 1
      %s167 = scalar_select %p166, %s14, 1
      %s168 = smul.addr %s167, 2
      %s169 = smul.addr %s168, 4
      %s170 = scalar_lea.vmem %s3, %s169
      %v172 = vld [vmem:[%s2] sm:$0x1]
      %v174 = vperm.slane %v172, 0
      %v176 = vld [vmem:[%s165] sm:$0xf]
      %v177 = vld [vmem:[%s165 + $0x4] sm:$0xf]
      %v178 = vld [vmem:[%s1] sm:$0xf]
      %v179 = vld [vmem:[%s1 + $0x4] sm:$0xf]
      %v180 = vld [vmem:[%s1 + $0x8] sm:$0xf]
      %v181 = vld [vmem:[%s1 + $0xc] sm:$0xf]
      %v182 = vld [vmem:[%s1 + $0x10] sm:$0xf]
      %v183 = vld [vmem:[%s1 + $0x14] sm:$0xf]
      %v184 = vld [vmem:[%s1 + $0x18] sm:$0xf]
      %v185 = vld [vmem:[%s1 + $0x1c] sm:$0xf]
      %v186 = vld [vmem:[%s1 + $0x20] sm:$0xf]
      %v189 = vunpack.c.l.b16 %v176
      %v190 = vunpack.c.l.b16 %v177
      %v191 = vpack.c.b16 %v190, %v189
      %v201 = vunpack.c.l.b16 %v178
      %v202 = vunpack.c.l.b16 %v179
      %v203 = vunpack.c.l.b16 %v180
      %v204 = vunpack.c.l.b16 %v181
      %v205 = vunpack.c.l.b16 %v182
      %v206 = vunpack.c.l.b16 %v183
      %v207 = vunpack.c.l.b16 %v184
      %v208 = vunpack.c.l.b16 %v185
      %v209 = vunpack.c.l.b16 %v186
      %v210 = vpack.c.b16 %v202, %v201
      %v211 = vpack.c.b16 %v204, %v203
      %v212 = vpack.c.b16 %v206, %v205
      %v213 = vpack.c.b16 %v208, %v207
      %v214 = vpack.c.b16 %v209, %v209
      %vm219 = vcmask 588800
      %v221 = vsel %vm219, %v191, 0
      %vm223 = vcmask 1043456
      %v225 = vsel %vm223, %v214, 0
      %227 = vmatpush.bf16.msra.mxu0 0
      %228 = vmatpush.bf16.msra.mxu0 0
      %229 = vmatpush.bf16.msra.mxu0 0
      %230 = vmatpush.bf16.msra.mxu0 %v225
      %231 = vmatpush.bf16.msra.mxu0 %v213
      %232 = vmatpush.bf16.msra.mxu0 %v212
      %233 = vmatpush.bf16.msra.mxu0 %v211
      %234 = vmatpush.bf16.msra.mxu0 %v210
      %235 = vmatmul.bf16.gmra.mxu0 %v221
      %v236 = vpop.f32.mrf.mxu0
      %v237 = vadd.f32 0.0, %v236
      %v238 = vpop.f32.mrf.mxu0
      %v239 = vadd.f32 0.0, %v238
      %240 = vdwg.mxu0
      %v241 = vadd.f32 %v174, %v237
      %v242 = vadd.f32 %v174, %v239
      %v243 = vld [vmem:[%s165] sm:$0xf]
      %v244 = vld [vmem:[%s165 + $0x4] sm:$0xf]
      %v245 = vld [vmem:[%s165 + $0x8] sm:$0x1]
      %s246 = scalar_lea.vmem %s1, 36
      %v247 = vld [vmem:[%s246] sm:$0xf]
      %v248 = vld [vmem:[%s246 + $0x4] sm:$0xf]
      %v249 = vld [vmem:[%s246 + $0x8] sm:$0xf]
      %v250 = vld [vmem:[%s246 + $0xc] sm:$0xf]
      %v251 = vld [vmem:[%s246 + $0x10] sm:$0xf]
      %v252 = vld [vmem:[%s246 + $0x14] sm:$0xf]
      %v253 = vld [vmem:[%s246 + $0x18] sm:$0xf]
      %v254 = vld [vmem:[%s246 + $0x1c] sm:$0xf]
      %v255 = vld [vmem:[%s246 + $0x20] sm:$0xf]
      %v259 = vunpack.c.l.b16 %v243
      %v260 = vunpack.c.l.b16 %v244
      %v261 = vunpack.c.l.b16 %v245
      %v262 = vpack.c.b16 %v260, %v259
      %v263 = vpack.c.b16 %v261, %v261
      %vm264 = vsmask.f32 7424
      %v266 = vshrl.u32 %v262, 16
      %v268 = vshll.u32 %v262, 16
      %v270 = vrot.slane %v268, 1
      %v271 = vor.u32 %v266, %v270
      %v273 = vshll.u32 %v263, 16
      %v275 = vrot.slane %v273, 1
      %v276 = vsel %vm264, %v271, %v275
      %v286 = vunpack.c.l.b16 %v247
      %v287 = vunpack.c.l.b16 %v248
      %v288 = vunpack.c.l.b16 %v249
      %v289 = vunpack.c.l.b16 %v250
      %v290 = vunpack.c.l.b16 %v251
      %v291 = vunpack.c.l.b16 %v252
      %v292 = vunpack.c.l.b16 %v253
      %v293 = vunpack.c.l.b16 %v254
      %v294 = vunpack.c.l.b16 %v255
      %v295 = vpack.c.b16 %v287, %v286
      %v296 = vpack.c.b16 %v289, %v288
      %v297 = vpack.c.b16 %v291, %v290
      %v298 = vpack.c.b16 %v293, %v292
      %v299 = vpack.c.b16 %v294, %v294
      %v305 = vsel %vm219, %v276, 0
      %v308 = vsel %vm223, %v299, 0
      %310 = vmatpush.bf16.msra.mxu0 0
      %311 = vmatpush.bf16.msra.mxu0 0
      %312 = vmatpush.bf16.msra.mxu0 0
      %313 = vmatpush.bf16.msra.mxu0 %v308
      %314 = vmatpush.bf16.msra.mxu0 %v298
      %315 = vmatpush.bf16.msra.mxu0 %v297
      %316 = vmatpush.bf16.msra.mxu0 %v296
      %317 = vmatpush.bf16.msra.mxu0 %v295
      %318 = vmatmul.bf16.gmra.mxu0 %v305
      %v319 = vpop.f32.mrf.mxu0
      %v320 = vadd.f32 0.0, %v319
      %v321 = vpop.f32.mrf.mxu0
      %v322 = vadd.f32 0.0, %v321
      %323 = vdwg.mxu0
      %v324 = vadd.f32 %v241, %v320
      %v325 = vadd.f32 %v242, %v322
      %v326 = vld [vmem:[%s165] sm:$0xe]
      %s327 = scalar_lea.vmem %s1, 72
      %v328 = vld [vmem:[%s327] sm:$0xf]
      %v329 = vld [vmem:[%s327 + $0x4] sm:$0xf]
      %v330 = vld [vmem:[%s327 + $0x8] sm:$0xf]
      %v331 = vld [vmem:[%s327 + $0xc] sm:$0xf]
      %v332 = vld [vmem:[%s327 + $0x10] sm:$0xf]
      %v333 = vld [vmem:[%s327 + $0x14] sm:$0xf]
      %v334 = vld [vmem:[%s327 + $0x18] sm:$0xf]
      %v335 = vld [vmem:[%s327 + $0x1c] sm:$0xf]
      %v336 = vld [vmem:[%s327 + $0x20] sm:$0xf]
      %v338 = vunpack.c.l.b16 %v326
      %v339 = vpack.c.b16 %v260, %v338
      %vm340 = vcmask 1046528
      %v341 = vrot.slane %v339, 1
      %v342 = vrot.slane %v263, 1
      %v343 = vsel %vm340, %v341, %v342
      %v353 = vunpack.c.l.b16 %v328
      %v354 = vunpack.c.l.b16 %v329
      %v355 = vunpack.c.l.b16 %v330
      %v356 = vunpack.c.l.b16 %v331
      %v357 = vunpack.c.l.b16 %v332
      %v358 = vunpack.c.l.b16 %v333
      %v359 = vunpack.c.l.b16 %v334
      %v360 = vunpack.c.l.b16 %v335
      %v361 = vunpack.c.l.b16 %v336
      %v362 = vpack.c.b16 %v354, %v353
      %v363 = vpack.c.b16 %v356, %v355
      %v364 = vpack.c.b16 %v358, %v357
      %v365 = vpack.c.b16 %v360, %v359
      %v366 = vpack.c.b16 %v361, %v361
      %v372 = vsel %vm219, %v343, 0
      %v375 = vsel %vm223, %v366, 0
      %377 = vmatpush.bf16.msra.mxu0 0
      %378 = vmatpush.bf16.msra.mxu0 0
      %379 = vmatpush.bf16.msra.mxu0 0
      %380 = vmatpush.bf16.msra.mxu0 %v375
      %381 = vmatpush.bf16.msra.mxu0 %v365
      %382 = vmatpush.bf16.msra.mxu0 %v364
      %383 = vmatpush.bf16.msra.mxu0 %v363
      %384 = vmatpush.bf16.msra.mxu0 %v362
      %385 = vmatmul.bf16.gmra.mxu0 %v372
      %v386 = vpop.f32.mrf.mxu0
      %v387 = vadd.f32 0.0, %v386
      %v388 = vpop.f32.mrf.mxu0
      %v389 = vadd.f32 0.0, %v388
      %390 = vdwg.mxu0
      %v391 = vadd.f32 %v324, %v387
      %v392 = vadd.f32 %v325, %v389
      %v393 = vsub.f32 0.0, %v391
      %v394 = vsub.f32 0.0, %v392
      %v395 = vmul.f32 %v393, 1.442695
      %v396 = vpow.pop %v395
      %v397 = vmul.f32 %v394, 1.442695
      %v398 = vpow.pop %v397
      %v399 = vadd.f32 %v396, 1.0
      %v400 = vadd.f32 %v398, 1.0
      %v401 = vrcp.pop %v399
      %v402 = vrcp.pop %v400
      %v403 = vmul.f32 %v391, %v401
      %v404 = vmul.f32 %v392, %v402
      %v405 = vpack.c.bf16 %v403, %v403
      %v406 = vpack.c.bf16 %v404, %v404
      %407 = vst [vmem:[%s170] sm:$0xf] %v405
      %408 = vst [vmem:[%s170 + $0x4] sm:$0xf] %v406
      %p409 = scmp.lt.s32.totalorder %s14, 1
      %s410 = scalar_select %p409, %s14, 1
      %s411 = smul.addr %s410, 2
      %s412 = smul.addr %s411, 4
      %s413 = scalar_lea.vmem %s3, %s412
      // Predicated region
      $region33: #{conv_bn_silu.1} parent=31 // pred_check
        %p414 = pneg %p100
      $region34: #{conv_bn_silu.1} parent=31 // pred_check_branch
        %416 = sbr.rel (%p414) target = $region36
      $region35: #{conv_bn_silu.1} parent=31 // pred_region
        _
      $region36: #{conv_bn_silu.1} parent=31 // pred_fallthru
        _
    $region32: #{conv_bn_silu.1} parent=5 // pred_fallthru
      _
    %p417 = scmp.le.s32.totalorder 2, %s9
    // Predicated region
    $region37: #{conv_bn_silu.1} parent=5 // pred_check
      %p418 = pneg %p417
    $region38: #{conv_bn_silu.1} parent=5 // pred_check_branch
      %420 = sbr.rel (%p418) target = $region40
    $region39: #{conv_bn_silu.1} parent=5 // pred_region
      %s421 = ssub.s32 %s9, 2
      // Predicated region
      $region41: #{conv_bn_silu.1} parent=39 // pred_check
        %p422 = pneg %p106
      $region42: #{conv_bn_silu.1} parent=39 // pred_check_branch
        %424 = sbr.rel (%p422) target = $region44
      $region43: #{conv_bn_silu.1} parent=39 // pred_region
        %p425 = scmp.lt.s32.totalorder %s15, 1
        %s426 = scalar_select %p425, %s15, 1
        %s427 = smul.addr %s426, 2
        %s428 = smul.addr %s427, 4
        %s429 = scalar_lea.vmem %s3, %s428
      $region44: #{conv_bn_silu.1} parent=39 // pred_fallthru
        _
    $region40: #{conv_bn_silu.1} parent=5 // pred_fallthru
      _
  $region6: #{conv_bn_silu.1} parent=0 // loop_footer
    %s13 = sadd.s32 1, %s9
  $region7: #{conv_bn_silu.1} parent=0 // loop_footer_branch
    %8 = sbr.rel target = $region3
  $region8: #{conv_bn_silu.1} parent=0 // loop_exit
    _

</llo_original>
